<compile_context>
chip_gen: v7x
topology: tpu7x:2x2x1
jax: 0.10.0
libtpu: 0.0.40
codegen_flags: <defaults>
</compile_context>

<pallas_src>
import functools

import jax
import jax.numpy as jnp
from jax.experimental import pallas as pl
from jax.experimental.pallas import tpu as pltpu


HIDDEN = 20


def mlp_kernel(x_ref, w1_ref, b1_ref, w2_ref, b2_ref, w3_ref, b3_ref, o_ref,
               *, act_dtype):
    x = x_ref[...]                                        # (1, TN)  f32

    # fc1: Linear(1, 20). Contraction dim is 1 -> pure broadcast multiply:
    # (20,1) * (1,TN) -> (20,TN). Bias is a (20,1) column broadcast over lanes.
    pre1 = w1_ref[...] * x + b1_ref[...]                  # (20, TN) f32
    h1 = jnp.tanh(pre1.astype(act_dtype))                 # EUP; bf16 halves pushes

    # fc2: Linear(20, 20) -- MXU matmul, f32 accumulation, lane-dense over N.
    pre2 = (
        jnp.dot(w2_ref[...].astype(act_dtype), h1,
                preferred_element_type=jnp.float32)
        + b2_ref[...]
    )                                                     # (20, TN) f32
    h2 = jnp.tanh(pre2.astype(act_dtype))                 # (20, TN)

    # fc3: Linear(20, 1) -- (1,20) @ (20,TN): contraction over the 20-dim,
    # result stays lane-dense over N (no cross-lane reduce, no masked store).
    out = (
        jnp.dot(w3_ref[...].astype(act_dtype), h2,
                preferred_element_type=jnp.float32)
        + b3_ref[...]
    )                                                     # (1, TN) f32
    o_ref[...] = out.astype(o_ref.dtype)


def _round_up(x, m):
    return (x + m - 1) // m * m


def _cdiv(a, b):
    return (a + b - 1) // b


@functools.partial(jax.jit, static_argnames=("tile_n", "use_bf16"))
def net_forward(x, w1, b1, w2, b2, w3, b3, *, tile_n=65536, use_bf16=False):
    """x: (N, 1) float32; weights in PyTorch (out, in) layout, biases (out, 1).

    Returns (N, 1) float32, matching the PyTorch Net forward pass exactly when
    use_bf16=False (default). use_bf16=True trades ~1e-2-level accuracy for
    ~2x steady-state throughput on v6e/v7x (bf16 tanh / MXU operands).
    """
    n = x.shape[0]
    act_dtype = jnp.bfloat16 if use_bf16 else jnp.float32

    # ---- batch tiling on the lane axis -----------------------------------
    # Tile is always a multiple of 128 (guards against bad tile_n values).
    n128 = _round_up(max(n, 1), 128)
    tn_max = max(128, _round_up(min(tile_n, n128), 128))
    num_tiles = _cdiv(n128, tn_max)
    # Megacore (v7x): give the "parallel" grid axis >= 2 steps whenever the
    # batch spans at least two minimal lane tiles.
    if num_tiles == 1 and n128 >= 256:
        num_tiles = 2
    # Balance the tile size across the chosen number of tiles (padding waste
    # is then at most 127 lanes + the rounding to 128 per tile).
    tn = _round_up(_cdiv(n128, num_tiles), 128)
    n_pad = num_tiles * tn
    grid_n = num_tiles

    # ---- VMEM budget for the chosen tile ----------------------------------
    # Worst-case f32 path per lane: x/out tiles padded to 8 sublanes and
    # double-buffered (2*2*8*4 = 128 B) + h1/h2 padded to 24 sublanes
    # (2*24*4 = 192 B) + temporaries -> budget 512 B/lane with margin.
    # Cap at 56 MiB so the limit is always physically valid (v7x: 64 MiB/TC).
    vmem_limit_bytes = int(
        min(max(512 * tn + (2 << 20), 16 << 20), 56 << 20))

    # Layout plumbing (wrapper-side, not kernel compute): batch -> lane axis.
    xt = x.reshape(1, n)
    if n_pad != n:
        xt = jnp.pad(xt, ((0, 0), (0, n_pad - n)))

    # Streaming specs for x / out; weights pinned to block (0, 0) every step
    # so the ~1.7 KiB of parameters stay VMEM-resident across grid iterations.
    x_spec = pl.BlockSpec((1, tn), lambda i: (0, i))
    o_spec = pl.BlockSpec((1, tn), lambda i: (0, i))

    def const_spec(arr):
        return pl.BlockSpec(arr.shape, lambda i: (0, 0))

    flops = 2 * n_pad * HIDDEN * HIDDEN + 4 * n_pad * HIDDEN
    cost = pl.CostEstimate(
        flops=flops,
        transcendentals=2 * HIDDEN * n_pad,               # two tanh passes
        bytes_accessed=8 * n_pad + 4 * (HIDDEN * HIDDEN + 4 * HIDDEN + 2),
    )

    out_t = pl.pallas_call(
        functools.partial(mlp_kernel, act_dtype=act_dtype),
        out_shape=jax.ShapeDtypeStruct((1, n_pad), jnp.float32),
        grid=(grid_n,),
        in_specs=[
            x_spec,
            const_spec(w1), const_spec(b1),
            const_spec(w2), const_spec(b2),
            const_spec(w3), const_spec(b3),
        ],
        out_specs=o_spec,
        compiler_params=pltpu.CompilerParams(
            dimension_semantics=("parallel",),            # megacore shard on v7x
            vmem_limit_bytes=vmem_limit_bytes,
        ),
        cost_estimate=cost,
    )(xt, w1, b1, w2, b2, w3, b3)                         # (1, n_pad)

    return out_t[:, :n].reshape(n, 1)


def init_params(key):
    """PyTorch-style Linear init (U[-1/sqrt(fan_in), 1/sqrt(fan_in)]).

    Weights stored as (out_features, in_features); biases as (out_features, 1).
    """
    k1, k2, k3, k4, k5, k6 = jax.random.split(key, 6)

    def unif(k, shape, fan_in):
        bound = 1.0 / jnp.sqrt(fan_in)
        return jax.random.uniform(k, shape, jnp.float32, -bound, bound)

    w1 = unif(k1, (HIDDEN, 1), 1.0)
    b1 = unif(k2, (HIDDEN, 1), 1.0)
    w2 = unif(k3, (HIDDEN, HIDDEN), float(HIDDEN))
    b2 = unif(k4, (HIDDEN, 1), float(HIDDEN))
    w3 = unif(k5, (1, HIDDEN), float(HIDDEN))
    b3 = unif(k6, (1, 1), float(HIDDEN))
    return w1, b1, w2, b2, w3, b3


def reference_forward(x, w1, b1, w2, b2, w3, b3):
    """Pure-JAX reference in row (batch-major) layout, PyTorch semantics."""
    h1 = jnp.tanh(x @ w1.T + b1.T)
    h2 = jnp.tanh(h1 @ w2.T + b2.T)
    return h2 @ w3.T + b3.T


if __name__ == "__main__":
    key = jax.random.PRNGKey(0)
    kx, kp = jax.random.split(key)

    params = init_params(kp)

    # Small batch (single tile, single grid step).
    batch = 8
    x = jax.random.normal(kx, (batch, 1), dtype=jnp.float32)
    y = jax.block_until_ready(net_forward(x, *params))
    y_ref = reference_forward(x, *params)
    assert y.shape == (batch, 1)
    assert jnp.allclose(y, y_ref, atol=1e-5, rtol=1e-5)

    # Multi-tile batch: exercises grid/padding and the >=2-step megacore split.
    big_n = 4096 + 37
    xb = jax.random.normal(kx, (big_n, 1), dtype=jnp.float32)
    yb = jax.block_until_ready(net_forward(xb, *params))
    yb_ref = reference_forward(xb, *params)
    assert yb.shape == (big_n, 1)
    assert jnp.allclose(yb, yb_ref, atol=1e-5, rtol=1e-5)

    # Opt-in bf16 activation path (v6e/v7x EUP optimization); looser tolerance.
    yb16 = jax.block_until_ready(net_forward(xb, *params, use_bf16=True))
    assert yb16.shape == (big_n, 1)
    assert jnp.allclose(yb16, yb_ref, atol=5e-2, rtol=5e-2)

    print("KERNEL_OK")
</pallas_src>

<mosaic_0001>
module attributes {stable_mosaic.version = 11 : i64} {
  func.func @mlp_kernel(%arg0: i32, %arg1: memref<1x128xf32, #tpu.memory_space<vmem>>, %arg2: memref<20x1xf32, #tpu.memory_space<vmem>>, %arg3: memref<20x1xf32, #tpu.memory_space<vmem>>, %arg4: memref<20x20xf32, #tpu.memory_space<vmem>>, %arg5: memref<20x1xf32, #tpu.memory_space<vmem>>, %arg6: memref<1x20xf32, #tpu.memory_space<vmem>>, %arg7: memref<1x1xf32, #tpu.memory_space<vmem>>, %arg8: memref<1x128xf32, #tpu.memory_space<vmem>>) attributes {dimension_semantics = [#tpu.dimension_semantics<parallel>], iteration_bounds = array<i64: 1>, scalar_prefetch = 0 : i64, scratch_operands = 0 : i64, tpu.core_type = #tpu.core_type<tc>, window_params = [{transform_indices = @transform_0, window_bounds = array<i64: 1, 128>}, {pipeline_mode = #tpu.pipeline_mode<synchronous>, transform_indices = @transform_1, window_bounds = array<i64: 20, 1>}, {pipeline_mode = #tpu.pipeline_mode<synchronous>, transform_indices = @transform_2, window_bounds = array<i64: 20, 1>}, {pipeline_mode = #tpu.pipeline_mode<synchronous>, transform_indices = @transform_3, window_bounds = array<i64: 20, 20>}, {pipeline_mode = #tpu.pipeline_mode<synchronous>, transform_indices = @transform_4, window_bounds = array<i64: 20, 1>}, {pipeline_mode = #tpu.pipeline_mode<synchronous>, transform_indices = @transform_5, window_bounds = array<i64: 1, 20>}, {pipeline_mode = #tpu.pipeline_mode<synchronous>, transform_indices = @transform_6, window_bounds = array<i64: 1, 1>}, {transform_indices = @transform_7, window_bounds = array<i64: 1, 128>}]} {
    %c0 = arith.constant 0 : index
    %c0_0 = arith.constant 0 : index
    %0 = vector.load %arg1[%c0, %c0_0] : memref<1x128xf32, #tpu.memory_space<vmem>>, vector<1x128xf32>
    %c0_1 = arith.constant 0 : index
    %c0_2 = arith.constant 0 : index
    %1 = vector.load %arg2[%c0_1, %c0_2] : memref<20x1xf32, #tpu.memory_space<vmem>>, vector<20x1xf32>
    %2 = vector.broadcast %1 : vector<20x1xf32> to vector<20x128xf32>
    %3 = vector.broadcast %0 : vector<1x128xf32> to vector<20x128xf32>
    %4 = arith.mulf %2, %3 : vector<20x128xf32>
    %c0_3 = arith.constant 0 : index
    %c0_4 = arith.constant 0 : index
    %5 = vector.load %arg3[%c0_3, %c0_4] : memref<20x1xf32, #tpu.memory_space<vmem>>, vector<20x1xf32>
    %6 = vector.broadcast %5 : vector<20x1xf32> to vector<20x128xf32>
    %7 = arith.addf %4, %6 : vector<20x128xf32>
    %8 = math.tanh %7 : vector<20x128xf32>
    %c0_5 = arith.constant 0 : index
    %c0_6 = arith.constant 0 : index
    %9 = vector.load %arg4[%c0_5, %c0_6] : memref<20x20xf32, #tpu.memory_space<vmem>>, vector<20x20xf32>
    %cst = arith.constant dense<0.000000e+00> : vector<20x128xf32>
    %10 = tpu.matmul %9, %8, %cst {dimension_numbers = #tpu.dot_dimension_numbers<[1], [0], [0], [1], [0, 0, 1, 1], [], []>} : vector<20x20xf32>, vector<20x128xf32>, vector<20x128xf32> -> vector<20x128xf32>
    %c0_7 = arith.constant 0 : index
    %c0_8 = arith.constant 0 : index
    %11 = vector.load %arg5[%c0_7, %c0_8] : memref<20x1xf32, #tpu.memory_space<vmem>>, vector<20x1xf32>
    %12 = vector.broadcast %11 : vector<20x1xf32> to vector<20x128xf32>
    %13 = arith.addf %10, %12 : vector<20x128xf32>
    %14 = math.tanh %13 : vector<20x128xf32>
    %c0_9 = arith.constant 0 : index
    %c0_10 = arith.constant 0 : index
    %15 = vector.load %arg6[%c0_9, %c0_10] : memref<1x20xf32, #tpu.memory_space<vmem>>, vector<1x20xf32>
    %cst_11 = arith.constant dense<0.000000e+00> : vector<1x128xf32>
    %16 = tpu.matmul %15, %14, %cst_11 {dimension_numbers = #tpu.dot_dimension_numbers<[1], [0], [0], [1], [0, 0, 1, 1], [], []>} : vector<1x20xf32>, vector<20x128xf32>, vector<1x128xf32> -> vector<1x128xf32>
    %c0_12 = arith.constant 0 : index
    %c0_13 = arith.constant 0 : index
    %17 = vector.load %arg7[%c0_12, %c0_13] : memref<1x1xf32, #tpu.memory_space<vmem>>, vector<1x1xf32>
    %18 = vector.broadcast %17 : vector<1x1xf32> to vector<1x128xf32>
    %19 = arith.addf %16, %18 : vector<1x128xf32>
    %c0_14 = arith.constant 0 : index
    %c0_15 = arith.constant 0 : index
    %20 = vector.load %arg8[%c0_14, %c0_15] : memref<1x128xf32, #tpu.memory_space<vmem>>, vector<1x128xf32>
    tpu.vector_store %arg8[%c0_14, %c0_15], %19 {strides = array<i32>} : memref<1x128xf32, #tpu.memory_space<vmem>>, vector<1x128xf32>,
    return
  }
  func.func @transform_0(%arg0: i32) -> (i32, i32) {
    %c0_i32 = arith.constant 0 : i32
    %c0_i32_0 = arith.constant 0 : i32
    return %c0_i32, %arg0 : i32, i32
  }
  func.func @transform_1(%arg0: i32) -> (i32, i32) {
    %c0_i32 = arith.constant 0 : i32
    %c0_i32_0 = arith.constant 0 : i32
    %c0_i32_1 = arith.constant 0 : i32
    return %c0_i32, %c0_i32_0 : i32, i32
  }
  func.func @transform_2(%arg0: i32) -> (i32, i32) {
    %c0_i32 = arith.constant 0 : i32
    %c0_i32_0 = arith.constant 0 : i32
    %c0_i32_1 = arith.constant 0 : i32
    return %c0_i32, %c0_i32_0 : i32, i32
  }
  func.func @transform_3(%arg0: i32) -> (i32, i32) {
    %c0_i32 = arith.constant 0 : i32
    %c0_i32_0 = arith.constant 0 : i32
    %c0_i32_1 = arith.constant 0 : i32
    return %c0_i32, %c0_i32_0 : i32, i32
  }
  func.func @transform_4(%arg0: i32) -> (i32, i32) {
    %c0_i32 = arith.constant 0 : i32
    %c0_i32_0 = arith.constant 0 : i32
    %c0_i32_1 = arith.constant 0 : i32
    return %c0_i32, %c0_i32_0 : i32, i32
  }
  func.func @transform_5(%arg0: i32) -> (i32, i32) {
    %c0_i32 = arith.constant 0 : i32
    %c0_i32_0 = arith.constant 0 : i32
    %c0_i32_1 = arith.constant 0 : i32
    return %c0_i32, %c0_i32_0 : i32, i32
  }
  func.func @transform_6(%arg0: i32) -> (i32, i32) {
    %c0_i32 = arith.constant 0 : i32
    %c0_i32_0 = arith.constant 0 : i32
    %c0_i32_1 = arith.constant 0 : i32
    return %c0_i32, %c0_i32_0 : i32, i32
  }
  func.func @transform_7(%arg0: i32) -> (i32, i32) {
    %c0_i32 = arith.constant 0 : i32
    %c0_i32_0 = arith.constant 0 : i32
    return %c0_i32, %arg0 : i32, i32
  }
}

</mosaic_0001>

<llo_original>
// kernel: net_forward.1
$region0: #{net_forward.1}
  #allocation0 [shape = 'u32[]', space=smem, size = 0x4, offset = 0x4, fixed_abs, tag = 'smem constant byte address 0x4 - core index']
  #allocation1 [shape = 'u32[144,128]{1,0:T(1,128)}', space=vmem, size = 0x12000, scoped, tag = 'internal scratch']
  #allocation2 [shape = 'f32[1,1]{1,0:T(1,128)S(1)}', space=vmem, size = 0x200, scoped, tag = 'scoped memory for net_forward.1']
  %s0 = inlined_call_operand.vmem [shape: f32[1,128], index: 0, kind: input, shape index: {}]
  %s1 = inlined_call_operand.vmem [shape: f32[20,1], index: 1, kind: input, shape index: {}]
  %s2 = inlined_call_operand.vmem [shape: f32[20,1], index: 2, kind: input, shape index: {}]
  %s3 = inlined_call_operand.vmem [shape: f32[20,20], index: 3, kind: input, shape index: {}]
  %s4 = inlined_call_operand.vmem [shape: f32[20,1], index: 4, kind: input, shape index: {}]
  %s5 = inlined_call_operand.vmem [shape: f32[1,20], index: 5, kind: input, shape index: {}]
  %s6 = inlined_call_operand.<no memory space> [shape: f32[1,1], index: 6, kind: input, shape index: {}]
  %s7 = inlined_call_operand.vmem [shape: f32[1,128], index: 7, kind: output, shape index: {}]
  %s8 = sld [smem:[#allocation0]]
  $region38: #{net_forward.1} parent=0
    _
  %s10 = ssub.s32 1, %s8
  %s11 = scalar_select 0, %s10, %s8
  %v12 = vstv %s6
  %13 = vst [vmem:[#allocation2] sm:$0x1] %v12
  // Predicated region
  $region2: #{net_forward.1} parent=0 // pred_check
    _
  $region3: #{net_forward.1} parent=0 // pred_check_branch
    %15 = sbr.rel (0) target = $region5
  $region4: #{net_forward.1} parent=0 // pred_region
    _
  $region5: #{net_forward.1} parent=0 // pred_fallthru
    _
  // Predicated region
  $region6: #{net_forward.1} parent=0 // pred_check
    _
  $region7: #{net_forward.1} parent=0 // pred_check_branch
    %17 = sbr.rel (0) target = $region9
  $region8: #{net_forward.1} parent=0 // pred_region
    _
  $region9: #{net_forward.1} parent=0 // pred_fallthru
    _
  // Predicated region
  $region10: #{net_forward.1} parent=0 // pred_check
    _
  $region11: #{net_forward.1} parent=0 // pred_check_branch
    %19 = sbr.rel (0) target = $region13
  $region12: #{net_forward.1} parent=0 // pred_region
    _
  $region13: #{net_forward.1} parent=0 // pred_fallthru
    _
  // Predicated region
  $region14: #{net_forward.1} parent=0 // pred_check
    _
  $region15: #{net_forward.1} parent=0 // pred_check_branch
    %21 = sbr.rel (0) target = $region17
  $region16: #{net_forward.1} parent=0 // pred_region
    _
  $region17: #{net_forward.1} parent=0 // pred_fallthru
    _
  // Predicated region
  $region18: #{net_forward.1} parent=0 // pred_check
    _
  $region19: #{net_forward.1} parent=0 // pred_check_branch
    %23 = sbr.rel (0) target = $region21
  $region20: #{net_forward.1} parent=0 // pred_region
    _
  $region21: #{net_forward.1} parent=0 // pred_fallthru
    _
  // Predicated region
  $region22: #{net_forward.1} parent=0 // pred_check
    _
  $region23: #{net_forward.1} parent=0 // pred_check_branch
    %25 = sbr.rel (0) target = $region25
  $region24: #{net_forward.1} parent=0 // pred_region
    _
  $region25: #{net_forward.1} parent=0 // pred_fallthru
    _
  // Predicated region
  $region26: #{net_forward.1} parent=0 // pred_check
    _
  $region27: #{net_forward.1} parent=0 // pred_check_branch
    %27 = sbr.rel (0) target = $region29
  $region28: #{net_forward.1} parent=0 // pred_region
    _
  $region29: #{net_forward.1} parent=0 // pred_fallthru
    _
  %v28 = vld [vmem:[%s0] sm:$0x1]
  %v29 = vld [vmem:[%s1] sm:$0xff]
  %v30 = vld [vmem:[%s1 + $0x8] sm:$0xff]
  %v31 = vld [vmem:[%s1 + $0x10] sm:$0xf]
  %33 = vset.pattern.permute.xlu0 0
  %34 = vperm.xlu0 %33, %v29
  %v35 = vpop.permute.xlu0 %34
  %38 = vset.pattern.permute.xlu0 0
  %39 = vperm.xlu0 %38, %v30
  %v40 = vpop.permute.xlu0 %39
  %43 = vset.pattern.permute.xlu0 0
  %44 = vperm.xlu0 %43, %v31
  %v45 = vpop.permute.xlu0 %44
  %v48 = vlaneseq
  %v49 = vshrl.u32 %v48, 7
  %v50 = vsub.s32 0, %v49
  %v51 = vrot.slane %v28, %v50
  %v53 = vmul.f32 %v35, %v51
  %v54 = vmul.f32 %v40, %v51
  %v55 = vmul.f32 %v45, %v51
  %v56 = vld [vmem:[%s2] sm:$0xff]
  %v57 = vld [vmem:[%s2 + $0x8] sm:$0xff]
  %v58 = vld [vmem:[%s2 + $0x10] sm:$0xf]
  %60 = vset.pattern.permute.xlu0 0
  %61 = vperm.xlu0 %60, %v56
  %v62 = vpop.permute.xlu0 %61
  %65 = vset.pattern.permute.xlu0 0
  %66 = vperm.xlu0 %65, %v57
  %v67 = vpop.permute.xlu0 %66
  %70 = vset.pattern.permute.xlu0 0
  %71 = vperm.xlu0 %70, %v58
  %v72 = vpop.permute.xlu0 %71
  %v74 = vadd.f32 %v53, %v62
  %v75 = vadd.f32 %v54, %v67
  %v76 = vadd.f32 %v55, %v72
  %v77 = vtanh.pop %v74
  %v78 = vtanh.pop %v75
  %v79 = vtanh.pop %v76
  %v80 = vld [vmem:[%s3] sm:$0xff]
  %v81 = vld [vmem:[%s3 + $0x8] sm:$0xff]
  %v82 = vld [vmem:[%s3 + $0x10] sm:$0xf]
  %v83 = vld [vmem:[%s4] sm:$0xff]
  %v84 = vld [vmem:[%s4 + $0x8] sm:$0xff]
  %v85 = vld [vmem:[%s4 + $0x10] sm:$0xf]
  %87 = vset.pattern.permute.xlu0 0
  %88 = vperm.xlu0 %87, %v83
  %v89 = vpop.permute.xlu0 %88
  %92 = vset.pattern.permute.xlu0 0
  %93 = vperm.xlu0 %92, %v84
  %v94 = vpop.permute.xlu0 %93
  %97 = vset.pattern.permute.xlu0 0
  %98 = vperm.xlu0 %97, %v85
  %v99 = vpop.permute.xlu0 %98
  %vm101 = vcmask 162816
  %v103 = vsel %vm101, %v80, 0
  %v106 = vsel %vm101, %v81, 0
  %v109 = vsel %vm101, %v82, 0
  %vm111 = vcmask 1043456
  %v113 = vsel %vm111, %v79, 0
  %115 = vmatprep.subr.mxu0 0.0
  %116 = vmatpush1.msra.mxu0 %v77
  %117 = vmatprep.subr.mxu0 0.0
  %118 = vmatpush1.msra.mxu0 %v78
  %119 = vmatprep.subr.mxu0 0.0
  %120 = vmatpush1.msra.mxu0 %v113
  %121 = vmatprep.subr.mxu0 0.0
  %122 = vmatpush1.msra.mxu0 0.0
  %123 = vmatprep.subr.mxu0 0.0
  %124 = vmatpush1.msra.mxu0 0.0
  %125 = vmatprep.subr.mxu0 0.0
  %126 = vmatpush1.msra.mxu0 0.0
  %127 = vmatprep.subr.mxu0 0.0
  %128 = vmatpush1.msra.mxu0 0.0
  %129 = vmatprep.subr.mxu0 0.0
  %130 = vmatpush1.msra.mxu0 0.0
  %131 = vmatprep.subr.mxu0 0.0
  %132 = vmatpush1.msra.mxu0 0.0
  %133 = vmatprep.subr.mxu0 0.0
  %134 = vmatpush1.msra.mxu0 0.0
  %135 = vmatprep.subr.mxu0 0.0
  %136 = vmatpush1.msra.mxu0 0.0
  %137 = vmatprep.subr.mxu0 0.0
  %138 = vmatpush1.msra.mxu0 0.0
  %139 = vmatprep.subr.mxu0 0.0
  %140 = vmatpush1.msra.mxu0 0.0
  %141 = vmatprep.subr.mxu0 0.0
  %142 = vmatpush1.msra.mxu0 0.0
  %143 = vmatprep.subr.mxu0 0.0
  %144 = vmatpush1.msra.mxu0 0.0
  %145 = vmatprep.subr.mxu0 0.0
  %146 = vmatpush1.msra.mxu0 0.0
  %147 = vmatprep.subr.mxu0 0.0
  %148 = vmatpush1.msra.mxu0 0.0
  %149 = vmatprep.subr.mxu0 0.0
  %150 = vmatpush1.msra.mxu0 0.0
  %151 = vmatprep.subr.mxu0 0.0
  %152 = vmatpush1.msra.mxu0 0.0
  %153 = vmatprep.subr.mxu0 0.0
  %154 = vmatpush1.msra.mxu0 0.0
  %155 = vmatprep.subr.mxu0 0.0
  %156 = vmatpush1.msra.mxu0 0.0
  %157 = vmatprep.subr.mxu0 0.0
  %158 = vmatpush1.msra.mxu0 0.0
  %159 = vmatprep.subr.mxu0 0.0
  %160 = vmatpush1.msra.mxu0 0.0
  %161 = vmatprep.subr.mxu0 0.0
  %162 = vmatpush1.msra.mxu0 0.0
  %163 = vmatprep.subr.mxu0 0.0
  %164 = vmatpush1.msra.mxu0 0.0
  %165 = vmatprep.subr.mxu0 0.0
  %166 = vmatpush1.msra.mxu0 0.0
  %167 = vmatprep.subr.mxu0 0.0
  %168 = vmatpush1.msra.mxu0 0.0
  %169 = vmatprep.subr.mxu0 0.0
  %170 = vmatpush1.msra.mxu0 0.0
  %171 = vmatprep.subr.mxu0 0.0
  %172 = vmatpush1.msra.mxu0 0.0
  %173 = vmatprep.subr.mxu0 0.0
  %174 = vmatpush1.msra.mxu0 0.0
  %175 = vmatprep.subr.mxu0 0.0
  %176 = vmatpush1.msra.mxu0 0.0
  %177 = vmatprep.subr.mxu0 0.0
  %178 = vmatpush1.msra.mxu0 0.0
  %179 = vmatprep.mubr.f32.mxu0 0.0
  %180 = vmatmul.mubr.f32.gmra.mrb[0].mxu0 %v103
  %v181 = vpop.f32.mrb[0].mxu0
  %v182 = vadd.f32 %v89, %v181
  %v183 = vpop.f32.mrb[0].mxu0
  %184 = vmatprep.mubr.f32.mxu0 0.0
  %185 = vmatmul.mubr.f32.gmra.mrb[0].mxu0 %v106
  %v186 = vpop.f32.mrb[0].mxu0
  %v187 = vadd.f32 %v94, %v186
  %v188 = vpop.f32.mrb[0].mxu0
  %189 = vmatprep.mubr.f32.mxu0 0.0
  %190 = vmatmul.mubr.f32.gmra.mrb[0].mxu0 %v109
  %v191 = vpop.f32.mrb[0].mxu0
  %v192 = vadd.f32 %v99, %v191
  %v193 = vpop.f32.mrb[0].mxu0
  %194 = vdwg.mxu0
  %v195 = vtanh.pop %v182
  %v196 = vtanh.pop %v187
  %v197 = vtanh.pop %v192
  %v198 = vld [vmem:[%s5] sm:$0x1]
  %v199 = vld [vmem:[#allocation2] sm:$0x1]
  %201 = vset.pattern.permute.xlu0 0
  %202 = vperm.xlu0 %201, %v199
  %v203 = vpop.permute.xlu0 %202
  %v205 = vlaneseq
  %v206 = vshrl.u32 %v205, 7
  %v207 = vsub.s32 0, %v206
  %v208 = vrot.slane %v203, %v207
  %v210 = vsel %vm101, %v198, 0
  %v213 = vsel %vm111, %v197, 0
  %215 = vmatprep.subr.mxu0 0.0
  %216 = vmatpush1.msra.mxu0 %v195
  %217 = vmatprep.subr.mxu0 0.0
  %218 = vmatpush1.msra.mxu0 %v196
  %219 = vmatprep.subr.mxu0 0.0
  %220 = vmatpush1.msra.mxu0 %v213
  %221 = vmatprep.subr.mxu0 0.0
  %222 = vmatpush1.msra.mxu0 0.0
  %223 = vmatprep.subr.mxu0 0.0
  %224 = vmatpush1.msra.mxu0 0.0
  %225 = vmatprep.subr.mxu0 0.0
  %226 = vmatpush1.msra.mxu0 0.0
  %227 = vmatprep.subr.mxu0 0.0
  %228 = vmatpush1.msra.mxu0 0.0
  %229 = vmatprep.subr.mxu0 0.0
  %230 = vmatpush1.msra.mxu0 0.0
  %231 = vmatprep.subr.mxu0 0.0
  %232 = vmatpush1.msra.mxu0 0.0
  %233 = vmatprep.subr.mxu0 0.0
  %234 = vmatpush1.msra.mxu0 0.0
  %235 = vmatprep.subr.mxu0 0.0
  %236 = vmatpush1.msra.mxu0 0.0
  %237 = vmatprep.subr.mxu0 0.0
  %238 = vmatpush1.msra.mxu0 0.0
  %239 = vmatprep.subr.mxu0 0.0
  %240 = vmatpush1.msra.mxu0 0.0
  %241 = vmatprep.subr.mxu0 0.0
  %242 = vmatpush1.msra.mxu0 0.0
  %243 = vmatprep.subr.mxu0 0.0
  %244 = vmatpush1.msra.mxu0 0.0
  %245 = vmatprep.subr.mxu0 0.0
  %246 = vmatpush1.msra.mxu0 0.0
  %247 = vmatprep.subr.mxu0 0.0
  %248 = vmatpush1.msra.mxu0 0.0
  %249 = vmatprep.subr.mxu0 0.0
  %250 = vmatpush1.msra.mxu0 0.0
  %251 = vmatprep.subr.mxu0 0.0
  %252 = vmatpush1.msra.mxu0 0.0
  %253 = vmatprep.subr.mxu0 0.0
  %254 = vmatpush1.msra.mxu0 0.0
  %255 = vmatprep.subr.mxu0 0.0
  %256 = vmatpush1.msra.mxu0 0.0
  %257 = vmatprep.subr.mxu0 0.0
  %258 = vmatpush1.msra.mxu0 0.0
  %259 = vmatprep.subr.mxu0 0.0
  %260 = vmatpush1.msra.mxu0 0.0
  %261 = vmatprep.subr.mxu0 0.0
  %262 = vmatpush1.msra.mxu0 0.0
  %263 = vmatprep.subr.mxu0 0.0
  %264 = vmatpush1.msra.mxu0 0.0
  %265 = vmatprep.subr.mxu0 0.0
  %266 = vmatpush1.msra.mxu0 0.0
  %267 = vmatprep.subr.mxu0 0.0
  %268 = vmatpush1.msra.mxu0 0.0
  %269 = vmatprep.subr.mxu0 0.0
  %270 = vmatpush1.msra.mxu0 0.0
  %271 = vmatprep.subr.mxu0 0.0
  %272 = vmatpush1.msra.mxu0 0.0
  %273 = vmatprep.subr.mxu0 0.0
  %274 = vmatpush1.msra.mxu0 0.0
  %275 = vmatprep.subr.mxu0 0.0
  %276 = vmatpush1.msra.mxu0 0.0
  %277 = vmatprep.subr.mxu0 0.0
  %278 = vmatpush1.msra.mxu0 0.0
  %279 = vmatprep.mubr.f32.mxu0 0.0
  %280 = vmatmul.mubr.f32.gmra.mrb[0].mxu0 %v210
  %v281 = vpop.f32.mrb[0].mxu0
  %v282 = vadd.f32 %v208, %v281
  %v283 = vpop.f32.mrb[0].mxu0
  %284 = vdwg.mxu0
  %285 = vst [vmem:[%s7] sm:$0x1] %v282
  // Predicated region
  $region30: #{net_forward.1} parent=0 // pred_check
    _
  $region31: #{net_forward.1} parent=0 // pred_check_branch
    %287 = sbr.rel (0) target = $region33
  $region32: #{net_forward.1} parent=0 // pred_region
    _
  $region33: #{net_forward.1} parent=0 // pred_fallthru
    _
  // Predicated region
  $region34: #{net_forward.1} parent=0 // pred_check
    _
  $region35: #{net_forward.1} parent=0 // pred_check_branch
    %289 = sbr.rel (0) target = $region37
  $region36: #{net_forward.1} parent=0 // pred_region
    _
  $region37: #{net_forward.1} parent=0 // pred_fallthru
    _

</llo_original>
